<compile_context>
chip_gen: v7x
topology: tpu7x:2x2x1
jax: 0.10.0
libtpu: 0.0.40
codegen_flags: <defaults>
</compile_context>

<pallas_src>
import functools

import jax
import jax.numpy as jnp
from jax.experimental import pallas as pl
from jax.experimental.pallas import tpu as pltpu


def _avg_pool_kernel(x_ref, m_ref, o_ref, *, K, S):
    # x_ref: (Pblk, Rin, W)      input rows for this plane/row-strip block
    # m_ref: (W, W_out) f32      W-window matrix, 1/(K*K) folded in
    # o_ref: (Pblk, Rout, W_out) pooled output block
    pblk, rout, w_out = o_ref.shape
    w = x_ref.shape[-1]

    def tap(kh):
        sl = pl.ds(kh, rout) if S == 1 else pl.ds(kh, rout, stride=S)
        return x_ref[:, sl, :].astype(jnp.float32)

    # H-direction: K strided taps straight from the ref; acc seeded from tap 0.
    acc = tap(0)
    for kh in range(1, K):
        acc = acc + tap(kh)

    # W-direction: a single MXU matmul against the pooling matrix.
    out = jnp.dot(acc.reshape(pblk * rout, w), m_ref[...],
                  preferred_element_type=jnp.float32)
    o_ref[...] = out.reshape(pblk, rout, w_out).astype(o_ref.dtype)


def avg_pool2d_pallas(x, kernel_size, stride):
    """avg_pool2d(x, kernel_size, stride), no padding (PyTorch semantics)."""
    N, C, H, W = x.shape
    K, S = int(kernel_size), int(stride)
    H_out = (H - K) // S + 1
    W_out = (W - K) // S + 1
    P = N * C
    db = jnp.dtype(x.dtype).itemsize

    # Metadata-only view: planes on the leading axis, W on lanes, H on sublanes.
    x3 = x.reshape(P, H, W)

    # W-window matrix with the 1/(K*K) average folded in.
    w_idx = jnp.arange(W, dtype=jnp.int32)[:, None]
    wo_idx = jnp.arange(W_out, dtype=jnp.int32)[None, :]
    pool_m = jnp.where((w_idx >= wo_idx * S) & (w_idx < wo_idx * S + K),
                       jnp.float32(1.0 / (K * K)), jnp.float32(0.0))

    # ---- block sizing: honest VMEM budget (x2 double-buffer + f32 temps) ----
    def block_bytes(pblk, rout, rin):
        in_b = pblk * rin * W * db
        out_b = pblk * rout * W_out * db
        acc_b = pblk * rout * W * 4        # f32 H-tap accumulator
        res_b = pblk * rout * W_out * 4    # f32 matmul result
        return 2 * (in_b + out_b) + acc_b + res_b

    target_bytes = 24 * 1024 * 1024  # ~8-10 MiB single-buffered blocks (v6e/v7x sweet spot)
    Pblk, Rout, Rin = P, H_out, H
    # Shrink the unconstrained plane axis first ...
    while Pblk > 1 and block_bytes(Pblk, Rout, Rin) > target_bytes:
        Pblk = pl.cdiv(Pblk, 2)
    # ... then output-row strips: exact (no halo) because Rin = Rout*S covers
    # every window when K <= S; strips stay multiples of 8 (sublane rule).
    if K <= S:
        while Rout > 8 and block_bytes(Pblk, Rout, Rin) > target_bytes:
            Rout = max(8, (Rout // 2) // 8 * 8)
            Rin = Rout * S
    # TODO(synk): halo'd row strips (pl.Element offsets) for K > stride so huge
    # images with overlapping windows also get bounded per-block VMEM.

    # Make sure the pipeline (and v7x's two TensorCores) see >= 2 blocks.
    if P > 1 and pl.cdiv(P, Pblk) * pl.cdiv(H_out, Rout) < 2:
        Pblk = pl.cdiv(P, 2)

    grid = (pl.cdiv(P, Pblk), pl.cdiv(H_out, Rout))

    cost = pl.CostEstimate(
        flops=2 * P * H_out * W * (K + W_out),
        transcendentals=0,
        bytes_accessed=P * (H * W + H_out * W_out) * db + W * W_out * 4,
    )

    out3 = pl.pallas_call(
        functools.partial(_avg_pool_kernel, K=K, S=S),
        out_shape=jax.ShapeDtypeStruct((P, H_out, W_out), x.dtype),
        grid=grid,
        in_specs=[
            pl.BlockSpec((Pblk, Rin, W), lambda p, h: (p, h, 0)),
            pl.BlockSpec((W, W_out), lambda p, h: (0, 0)),
        ],
        out_specs=pl.BlockSpec((Pblk, Rout, W_out), lambda p, h: (p, h, 0)),
        compiler_params=pltpu.CompilerParams(
            dimension_semantics=("parallel", "parallel"),
            vmem_limit_bytes=48 * 1024 * 1024,
        ),
        cost_estimate=cost,
    )(x3, pool_m)

    # Split the leading axis back to (N, C): metadata-only.
    return out3.reshape(N, C, H_out, W_out)


def _avg_pool2d_ref(x, K, S):
    summed = jax.lax.reduce_window(
        x, 0.0, jax.lax.add,
        window_dimensions=(1, 1, K, K),
        window_strides=(1, 1, S, S),
        padding="VALID",
    )
    return summed / (K * K)


if __name__ == "__main__":
    kernel_size = 2
    stride = 2

    key = jax.random.PRNGKey(0)
    x = jax.random.normal(key, (2, 4, 16, 16), dtype=jnp.float32)

    out = avg_pool2d_pallas(x, kernel_size, stride)
    out = jax.block_until_ready(out)

    ref = _avg_pool2d_ref(x, kernel_size, stride)
    assert out.shape == ref.shape, (out.shape, ref.shape)
    assert jnp.allclose(out, ref, atol=1e-5, rtol=1e-5)

    print("KERNEL_OK")
</pallas_src>

<mosaic_0001>
module attributes {stable_mosaic.version = 11 : i64} {
  func.func @_avg_pool_kernel(%arg0: i32, %arg1: i32, %arg2: memref<4x16x16xf32, #tpu.memory_space<vmem>>, %arg3: memref<16x8xf32, #tpu.memory_space<vmem>>, %arg4: memref<4x8x8xf32, #tpu.memory_space<vmem>>) attributes {dimension_semantics = [#tpu.dimension_semantics<parallel>, #tpu.dimension_semantics<parallel>], iteration_bounds = array<i64: 2, 1>, scalar_prefetch = 0 : i64, scratch_operands = 0 : i64, tpu.core_type = #tpu.core_type<tc>, window_params = [{transform_indices = @transform_0, window_bounds = array<i64: 4, 16, 16>}, {pipeline_mode = #tpu.pipeline_mode<synchronous>, transform_indices = @transform_1, window_bounds = array<i64: 16, 8>}, {transform_indices = @transform_2, window_bounds = array<i64: 4, 8, 8>}]} {
    %c0 = arith.constant 0 : index
    %c0_0 = arith.constant 0 : index
    %c0_1 = arith.constant 0 : index
    %0 = tpu.strided_load %arg2[%c0, %c0_0, %c0_1] {strides = array<i32: 1, 2, 1>} : memref<4x16x16xf32, #tpu.memory_space<vmem>>, vector<4x8x16xf32>
    %c0_2 = arith.constant 0 : index
    %c1 = arith.constant 1 : index
    %c0_3 = arith.constant 0 : index
    %1 = tpu.strided_load %arg2[%c0_2, %c1, %c0_3] {strides = array<i32: 1, 2, 1>} : memref<4x16x16xf32, #tpu.memory_space<vmem>>, vector<4x8x16xf32>
    %2 = arith.addf %0, %1 : vector<4x8x16xf32>
    %3 = vector.shape_cast %2 : vector<4x8x16xf32> to vector<32x16xf32>
    %c0_4 = arith.constant 0 : index
    %c0_5 = arith.constant 0 : index
    %4 = vector.load %arg3[%c0_4, %c0_5] : memref<16x8xf32, #tpu.memory_space<vmem>>, vector<16x8xf32>
    %cst = arith.constant dense<0.000000e+00> : vector<32x8xf32>
    %5 = tpu.matmul %3, %4, %cst {dimension_numbers = #tpu.dot_dimension_numbers<[1], [0], [0], [1], [0, 0, 1, 1], [], []>} : vector<32x16xf32>, vector<16x8xf32>, vector<32x8xf32> -> vector<32x8xf32>
    %6 = vector.shape_cast %5 : vector<32x8xf32> to vector<4x8x8xf32>
    %c0_6 = arith.constant 0 : index
    %c0_7 = arith.constant 0 : index
    %c0_8 = arith.constant 0 : index
    %7 = vector.load %arg4[%c0_6, %c0_7, %c0_8] : memref<4x8x8xf32, #tpu.memory_space<vmem>>, vector<4x8x8xf32>
    tpu.vector_store %arg4[%c0_6, %c0_7, %c0_8], %6 {strides = array<i32>} : memref<4x8x8xf32, #tpu.memory_space<vmem>>, vector<4x8x8xf32>,
    return
  }
  func.func @transform_0(%arg0: i32, %arg1: i32) -> (i32, i32, i32) {
    %c0_i32 = arith.constant 0 : i32
    %c0_i32_0 = arith.constant 0 : i32
    return %arg0, %arg1, %c0_i32 : i32, i32, i32
  }
  func.func @transform_1(%arg0: i32, %arg1: i32) -> (i32, i32) {
    %c0_i32 = arith.constant 0 : i32
    %c0_i32_0 = arith.constant 0 : i32
    %c0_i32_1 = arith.constant 0 : i32
    return %c0_i32, %c0_i32_0 : i32, i32
  }
  func.func @transform_2(%arg0: i32, %arg1: i32) -> (i32, i32, i32) {
    %c0_i32 = arith.constant 0 : i32
    %c0_i32_0 = arith.constant 0 : i32
    return %arg0, %arg1, %c0_i32 : i32, i32, i32
  }
}

</mosaic_0001>

<llo_original>
// kernel: tpu_custom_call.1
$region0: #{tpu_custom_call.1}
  #allocation0 [shape = 'u32[]', space=smem, size = 0x4, offset = 0x4, fixed_abs, tag = 'smem constant byte address 0x4 - core index']
  #allocation1 [shape = 'u32[144,128]{1,0:T(1,128)}', space=vmem, size = 0x12000, scoped, tag = 'internal scratch']
  %s0 = inlined_call_operand.hbm [shape: f32[8,16,16], index: 0, kind: input, shape index: {}]
  %s1 = inlined_call_operand.vmem [shape: f32[16,8], index: 1, kind: input, shape index: {}]
  %s2 = inlined_call_operand.hbm [shape: f32[8,8,8], index: 2, kind: output, shape index: {}]
  %s3 = sld [smem:[#allocation0]]
  $region45: #{tpu_custom_call.1} parent=0
    _
  %s5 = ssub.s32 1, %s3
  %s6 = scalar_select 0, %s5, %s3
  $region1: #{tpu_custom_call.1} parent=0
    #allocation2 [shape = 'u8[65536]{0}', space=vmem, size = 0x10000, scoped, tag = 'input window, operand 0']
    #allocation3 [shape = 's32[2]{0}', space=sflag, size = 0x8, scoped, tag = 'scoped memory for tpu_custom_call.1']
    #allocation4 [shape = 's32[2]{0}', space=sflag, size = 0x8, scoped, tag = 'scoped memory for tpu_custom_call.1']
    #allocation5 [shape = 'u8[32768]{0}', space=vmem, size = 0x8000, scoped, tag = 'output window, operand 0']
    %7 = vsyncpa [#allocation3], 0
    %s8 = scalar_lea.sflag [#allocation3], 1
    %9 = vsyncpa %s8, 0
    %10 = vsyncpa [#allocation4], 0
    %s11 = scalar_lea.sflag [#allocation4], 1
    %12 = vsyncpa %s11, 0
    loop: start=0, step=1, limit=4
    $region2: #{tpu_custom_call.1} parent=1 // loop_pre_header
      _
    $region3: #{tpu_custom_call.1} parent=1 // loop_header
      %s14 = sphi 0, %s18
      %p15 = scmp.ge.s32.totalorder %s14, 4
      %s21 = sphi 0, %s33
      %s22 = sphi 0, %s29
      %s23 = sphi 0, %s21
      %s24 = sphi 0, %s22
      %s25 = sphi 0, %s23
      %s26 = sphi 0, %s24
      %s38 = sphi 0, %s40
      %s41 = sphi 0, %s38
      %s42 = sphi 0, %s41
      %s58 = sphi 0, %s42
      %s62 = sphi 0, %s62
      %s64 = sphi 0, %s62
      %s65 = sphi 0, %s64
      %s79 = sphi 0, %s65
      %s87 = sphi 0, %s89
      %s90 = sphi 0, %s87
      %s91 = sphi 0, %s90
      %s107 = sphi 0, %s91
    $region4: #{tpu_custom_call.1} parent=1 // loop_header_branch
      %17 = sbr.rel (%p15) target = $region8
    $region5: #{tpu_custom_call.1} parent=1 // loop_body
      %s19 = ssub.s32 %s14, 1
      %s20 = ssub.s32 %s14, 2
      %s27 = sadd.s32 1, %s22
      %p28 = scmp.ge.s32.totalorder %s27, 1
      %s29 = scalar_select %p28, 0, %s27
      %s30 = sadd.s32 1, %s21
      %s31 = scalar_select %p28, %s30, %s21
      %p32 = scmp.ge.s32.totalorder %s31, 2
      %s33 = scalar_select %p32, 0, %s31
      %s34 = ssub.s32 %s21, %s33
      %s35 = ssub.s32 %s22, %s29
      %s36 = sor.u32 %s34, %s35
      %p37 = scmp.eq.s32.totalorder %s36, 0
      %s39 = sadd.s32 %s38, 1
      %s40 = scalar_select %p37, %s38, %s39
      %p43 = pneg %p37
      %p44 = scmp.eq.s32.totalorder %s14, 1
      %p45 = por %p43, %p44
      %p46 = scmp.ne.s32.totalorder %s38, %s41
      %p47 = scmp.eq.s32.totalorder %s14, 0
      %p48 = por %p46, %p47
      %p49 = scmp.ne.s32.totalorder %s38, %s41
      %p50 = scmp.eq.s32.totalorder %s19, 1
      %p51 = por %p49, %p50
      %p52 = scmp.ne.s32.totalorder %s41, %s42
      %p53 = scmp.eq.s32.totalorder %s19, 0
      %p54 = por %p52, %p53
      %p55 = scmp.ne.s32.totalorder %s41, %s42
      %p56 = scmp.eq.s32.totalorder %s20, 1
      %p57 = por %p55, %p56
      %p59 = scmp.ne.s32.totalorder %s42, %s58
      %p60 = scmp.eq.s32.totalorder %s20, 0
      %p61 = por %p59, %p60
      %s63 = sadd.s32 %s62, 1
      %p66 = scmp.eq.s32.totalorder %s14, 1
      %p67 = scmp.ne.s32.totalorder %s62, %s64
      %p68 = scmp.eq.s32.totalorder %s14, 0
      %p69 = por %p67, %p68
      %p70 = scmp.ne.s32.totalorder %s62, %s64
      %p71 = scmp.eq.s32.totalorder %s19, 1
      %p72 = por %p70, %p71
      %p73 = scmp.ne.s32.totalorder %s64, %s65
      %p74 = scmp.eq.s32.totalorder %s19, 0
      %p75 = por %p73, %p74
      %p76 = scmp.ne.s32.totalorder %s64, %s65
      %p77 = scmp.eq.s32.totalorder %s20, 1
      %p78 = por %p76, %p77
      %p80 = scmp.ne.s32.totalorder %s65, %s79
      %p81 = scmp.eq.s32.totalorder %s20, 0
      %p82 = por %p80, %p81
      %s83 = ssub.s32 %s21, %s33
      %s84 = ssub.s32 %s22, %s29
      %s85 = sor.u32 %s83, %s84
      %p86 = scmp.eq.s32.totalorder %s85, 0
      %s88 = sadd.s32 %s87, 1
      %s89 = scalar_select %p86, %s87, %s88
      %p92 = pneg %p86
      %p93 = scmp.eq.s32.totalorder %s14, 1
      %p94 = por %p92, %p93
      %p95 = scmp.ne.s32.totalorder %s87, %s90
      %p96 = scmp.eq.s32.totalorder %s14, 0
      %p97 = por %p95, %p96
      %p98 = scmp.ne.s32.totalorder %s87, %s90
      %p99 = scmp.eq.s32.totalorder %s19, 1
      %p100 = por %p98, %p99
      %p101 = scmp.ne.s32.totalorder %s90, %s91
      %p102 = scmp.eq.s32.totalorder %s19, 0
      %p103 = por %p101, %p102
      %p104 = scmp.ne.s32.totalorder %s90, %s91
      %p105 = scmp.eq.s32.totalorder %s20, 1
      %p106 = por %p104, %p105
      %p108 = scmp.ne.s32.totalorder %s91, %s107
      %p109 = scmp.eq.s32.totalorder %s20, 0
      %p110 = por %p108, %p109
      %p111 = scmp.le.s32.totalorder 1, %s14
      %p112 = scmp.lt.s32.totalorder %s14, 3
      %p113 = pnand %p111, %p112
      %p114 = pneg %p113
      // Predicated region
      $region9: #{tpu_custom_call.1} parent=5 // pred_check
        _
      $region10: #{tpu_custom_call.1} parent=5 // pred_check_branch
        %116 = sbr.rel (%p113) target = $region12
      $region11: #{tpu_custom_call.1} parent=5 // pred_region
        %s117 = ssub.s32 %s14, 1
        // Predicated region
        $region13: #{tpu_custom_call.1} parent=11 // pred_check
          %p118 = pneg %p75
        $region14: #{tpu_custom_call.1} parent=11 // pred_check_branch
          %120 = sbr.rel (%p118) target = $region16
        $region15: #{tpu_custom_call.1} parent=11 // pred_region
          _
        $region16: #{tpu_custom_call.1} parent=11 // pred_fallthru
          _
      $region12: #{tpu_custom_call.1} parent=5 // pred_fallthru
        _
      %p121 = scmp.lt.s32.totalorder %s14, 2
      // Predicated region
      $region17: #{tpu_custom_call.1} parent=5 // pred_check
        %p122 = pneg %p121
      $region18: #{tpu_custom_call.1} parent=5 // pred_check_branch
        %124 = sbr.rel (%p122) target = $region20
      $region19: #{tpu_custom_call.1} parent=5 // pred_region
        // Predicated region
        $region21: #{tpu_custom_call.1} parent=19 // pred_check
          %p125 = pneg %p48
        $region22: #{tpu_custom_call.1} parent=19 // pred_check_branch
          %127 = sbr.rel (%p125) target = $region24
        $region23: #{tpu_custom_call.1} parent=19 // pred_region
          %s128 = sand.u32 %s38, 1
          %s129 = scalar_lea.sflag [#allocation3], %s128
          %s130 = sand.u32 %s38, 1
          %s131 = smul.addr %s130, 64
          %s132 = scalar_lea.vmem [#allocation2], %s131
          %s133 = smul.u32 4, %s21
          %s134 = smul.u32 2, %s22
          %s136 = ssub.s32 1024, 1024
          %137 = vsyncadd %s129, %s136
          %s138 = smul.addr %s133, 2
          %s139 = sadd.s32 %s134, %s138
          %s140 = smul.addr %s139, 128
          %s141 = scalar_lea.hbm %s0, %s140
          %s142 = sshll.u32 %s132, 4
          %s143 = int_to_ptr.vmem [resolvable:$true] %s142
          %148 = dma.hbm_to_vmem [thread:$0]  %s141, 1024, %s143, %s129, 128, 128, 8
        $region24: #{tpu_custom_call.1} parent=19 // pred_fallthru
          _
      $region20: #{tpu_custom_call.1} parent=5 // pred_fallthru
        _
      %p149 = scmp.le.s32.totalorder 1, %s14
      %p150 = scmp.lt.s32.totalorder %s14, 3
      %p151 = pnand %p149, %p150
      %p152 = pneg %p151
      // Predicated region
      $region25: #{tpu_custom_call.1} parent=5 // pred_check
        _
      $region26: #{tpu_custom_call.1} parent=5 // pred_check_branch
        %154 = sbr.rel (%p151) target = $region28
      $region27: #{tpu_custom_call.1} parent=5 // pred_region
        %s155 = ssub.s32 %s14, 1
        %s156 = sand.u32 %s41, 1
        %s157 = scalar_lea.sflag [#allocation3], %s156
        %s158 = sand.u32 %s41, 1
        %s159 = smul.addr %s158, 64
        %s160 = scalar_lea.vmem [#allocation2], %s159
        // Predicated region
        $region29: #{tpu_custom_call.1} parent=27 // pred_check
          %p161 = pneg %p54
        $region30: #{tpu_custom_call.1} parent=27 // pred_check_branch
          %163 = sbr.rel (%p161) target = $region32
        $region31: #{tpu_custom_call.1} parent=27 // pred_region
          %164 = dma.done %s157, 1024
        $region32: #{tpu_custom_call.1} parent=27 // pred_fallthru
          _
        %s165 = sand.u32 %s41, 1
        %s166 = scalar_lea.sflag [#allocation3], %s165
        %s167 = sand.u32 %s41, 1
        %s168 = smul.addr %s167, 64
        %s169 = scalar_lea.vmem [#allocation2], %s168
        %p170 = pneg %p54
        %p171 = pneg %p51
        %p172 = pneg %p75
        %p173 = pneg %p72
        %p174 = pneg %p103
        %p175 = pneg %p100
        %s176 = sand.u32 %s90, 1
        %s177 = scalar_lea.sflag [#allocation4], %s176
        %s178 = sand.u32 %s90, 1
        %s179 = smul.addr %s178, 32
        %s180 = scalar_lea.vmem [#allocation5], %s179
        %s181 = smul.u32 4, %s23
        %s182 = smul.u32 2, %s24
        %s183 = smul.u32 4, %s23
        %v184 = vld [vmem:[%s160] ss:$2 sm:$0xff]
        %s185 = scalar_lea.vmem %s160, 16 [#allocation2]
        %v186 = vld [vmem:[%s185] ss:$2 sm:$0xff]
        %s187 = scalar_lea.vmem %s160, 32 [#allocation2]
        %v188 = vld [vmem:[%s187] ss:$2 sm:$0xff]
        %s189 = scalar_lea.vmem %s160, 48 [#allocation2]
        %v190 = vld [vmem:[%s189] ss:$2 sm:$0xff]
        %s191 = scalar_lea.vmem %s160, 1 [#allocation2]
        %v192 = vld [vmem:[%s191] ss:$2 sm:$0xff]
        %s193 = scalar_lea.vmem %s160, 17 [#allocation2]
        %v194 = vld [vmem:[%s193] ss:$2 sm:$0xff]
        %s195 = scalar_lea.vmem %s160, 33 [#allocation2]
        %v196 = vld [vmem:[%s195] ss:$2 sm:$0xff]
        %s197 = scalar_lea.vmem %s160, 49 [#allocation2]
        %v198 = vld [vmem:[%s197] ss:$2 sm:$0xff]
        %v199 = vadd.f32 %v184, %v192
        %v200 = vadd.f32 %v186, %v194
        %v201 = vadd.f32 %v188, %v196
        %v202 = vadd.f32 %v190, %v198
        %v203 = vld [vmem:[%s1] sm:$0xff]
        %v204 = vld [vmem:[%s1 + $0x8] sm:$0xff]
        %vm205 = vcmask 130048
        %v207 = vsel %vm205, %v199, 0
        %v210 = vsel %vm205, %v200, 0
        %v213 = vsel %vm205, %v201, 0
        %v216 = vsel %vm205, %v202, 0
        %218 = vmatprep.subr.mxu0 0.0
        %219 = vmatpush1.msra.mxu0 %v203
        %220 = vmatprep.subr.mxu0 0.0
        %221 = vmatpush1.msra.mxu0 %v204
        %222 = vmatprep.subr.mxu0 0.0
        %223 = vmatpush1.msra.mxu0 0.0
        %224 = vmatprep.subr.mxu0 0.0
        %225 = vmatpush1.msra.mxu0 0.0
        %226 = vmatprep.subr.mxu0 0.0
        %227 = vmatpush1.msra.mxu0 0.0
        %228 = vmatprep.subr.mxu0 0.0
        %229 = vmatpush1.msra.mxu0 0.0
        %230 = vmatprep.subr.mxu0 0.0
        %231 = vmatpush1.msra.mxu0 0.0
        %232 = vmatprep.subr.mxu0 0.0
        %233 = vmatpush1.msra.mxu0 0.0
        %234 = vmatprep.subr.mxu0 0.0
        %235 = vmatpush1.msra.mxu0 0.0
        %236 = vmatprep.subr.mxu0 0.0
        %237 = vmatpush1.msra.mxu0 0.0
        %238 = vmatprep.subr.mxu0 0.0
        %239 = vmatpush1.msra.mxu0 0.0
        %240 = vmatprep.subr.mxu0 0.0
        %241 = vmatpush1.msra.mxu0 0.0
        %242 = vmatprep.subr.mxu0 0.0
        %243 = vmatpush1.msra.mxu0 0.0
        %244 = vmatprep.subr.mxu0 0.0
        %245 = vmatpush1.msra.mxu0 0.0
        %246 = vmatprep.subr.mxu0 0.0
        %247 = vmatpush1.msra.mxu0 0.0
        %248 = vmatprep.subr.mxu0 0.0
        %249 = vmatpush1.msra.mxu0 0.0
        %250 = vmatprep.subr.mxu0 0.0
        %251 = vmatpush1.msra.mxu0 0.0
        %252 = vmatprep.subr.mxu0 0.0
        %253 = vmatpush1.msra.mxu0 0.0
        %254 = vmatprep.subr.mxu0 0.0
        %255 = vmatpush1.msra.mxu0 0.0
        %256 = vmatprep.subr.mxu0 0.0
        %257 = vmatpush1.msra.mxu0 0.0
        %258 = vmatprep.subr.mxu0 0.0
        %259 = vmatpush1.msra.mxu0 0.0
        %260 = vmatprep.subr.mxu0 0.0
        %261 = vmatpush1.msra.mxu0 0.0
        %262 = vmatprep.subr.mxu0 0.0
        %263 = vmatpush1.msra.mxu0 0.0
        %264 = vmatprep.subr.mxu0 0.0
        %265 = vmatpush1.msra.mxu0 0.0
        %266 = vmatprep.subr.mxu0 0.0
        %267 = vmatpush1.msra.mxu0 0.0
        %268 = vmatprep.subr.mxu0 0.0
        %269 = vmatpush1.msra.mxu0 0.0
        %270 = vmatprep.subr.mxu0 0.0
        %271 = vmatpush1.msra.mxu0 0.0
        %272 = vmatprep.subr.mxu0 0.0
        %273 = vmatpush1.msra.mxu0 0.0
        %274 = vmatprep.subr.mxu0 0.0
        %275 = vmatpush1.msra.mxu0 0.0
        %276 = vmatprep.subr.mxu0 0.0
        %277 = vmatpush1.msra.mxu0 0.0
        %278 = vmatprep.subr.mxu0 0.0
        %279 = vmatpush1.msra.mxu0 0.0
        %280 = vmatprep.subr.mxu0 0.0
        %281 = vmatpush1.msra.mxu0 0.0
        %282 = vmatprep.mubr.f32.mxu0 0.0
        %283 = vmatmul.mubr.f32.gmra.mrb[0].mxu0 %v207
        %v284 = vpop.f32.mrb[0].mxu0
        %v285 = vadd.f32 0.0, %v284
        %v286 = vpop.f32.mrb[0].mxu0
        %287 = vmatprep.mubr.f32.mxu0 0.0
        %288 = vmatmul.mubr.f32.gmra.mrb[0].mxu0 %v210
        %v289 = vpop.f32.mrb[0].mxu0
        %v290 = vadd.f32 0.0, %v289
        %v291 = vpop.f32.mrb[0].mxu0
        %292 = vmatprep.mubr.f32.mxu0 0.0
        %293 = vmatmul.mubr.f32.gmra.mrb[0].mxu0 %v213
        %v294 = vpop.f32.mrb[0].mxu0
        %v295 = vadd.f32 0.0, %v294
        %v296 = vpop.f32.mrb[0].mxu0
        %297 = vmatprep.mubr.f32.mxu0 0.0
        %298 = vmatmul.mubr.f32.gmra.mrb[0].mxu0 %v216
        %v299 = vpop.f32.mrb[0].mxu0
        %v300 = vadd.f32 0.0, %v299
        %v301 = vpop.f32.mrb[0].mxu0
        %302 = vdwg.mxu0
        %vm303 = vcmask 64512
        %304 = vst.msk [vmem:[%s180] sm:$0xff] %vm303, %v285
        %305 = vst.msk [vmem:[%s180 + $0x8] sm:$0xff] %vm303, %v290
        %306 = vst.msk [vmem:[%s180 + $0x10] sm:$0xff] %vm303, %v295
        %307 = vst.msk [vmem:[%s180 + $0x18] sm:$0xff] %vm303, %v300
        %s308 = sand.u32 %s90, 1
        %s309 = scalar_lea.sflag [#allocation4], %s308
        %s310 = sand.u32 %s90, 1
        %s311 = smul.addr %s310, 32
        %s312 = scalar_lea.vmem [#allocation5], %s311
        // Predicated region
        $region33: #{tpu_custom_call.1} parent=27 // pred_check
          %p313 = pneg %p100
        $region34: #{tpu_custom_call.1} parent=27 // pred_check_branch
          %315 = sbr.rel (%p313) target = $region36
        $region35: #{tpu_custom_call.1} parent=27 // pred_region
          %s316 = smul.u32 4, %s23
          %s318 = ssub.s32 512, 512
          %319 = vsyncadd %s309, %s318
          %s320 = sadd.s32 %s24, %s316
          %s321 = smul.addr %s320, 128
          %s322 = scalar_lea.hbm %s2, %s321
          %s323 = sshll.u32 %s312, 4
          %s324 = int_to_ptr.vmem [resolvable:$true] %s323
          %329 = dma.vmem_to_hbm [thread:$0]  %s324, 512, %s322, %s309, 128, 128, 8
        $region36: #{tpu_custom_call.1} parent=27 // pred_fallthru
          _
      $region28: #{tpu_custom_call.1} parent=5 // pred_fallthru
        _
      %p330 = scmp.le.s32.totalorder 2, %s14
      // Predicated region
      $region37: #{tpu_custom_call.1} parent=5 // pred_check
        %p331 = pneg %p330
      $region38: #{tpu_custom_call.1} parent=5 // pred_check_branch
        %333 = sbr.rel (%p331) target = $region40
      $region39: #{tpu_custom_call.1} parent=5 // pred_region
        %s334 = ssub.s32 %s14, 2
        // Predicated region
        $region41: #{tpu_custom_call.1} parent=39 // pred_check
          %p335 = pneg %p106
        $region42: #{tpu_custom_call.1} parent=39 // pred_check_branch
          %337 = sbr.rel (%p335) target = $region44
        $region43: #{tpu_custom_call.1} parent=39 // pred_region
          %s338 = sand.u32 %s91, 1
          %s339 = scalar_lea.sflag [#allocation4], %s338
          %s340 = sand.u32 %s91, 1
          %s341 = smul.addr %s340, 32
          %s342 = scalar_lea.vmem [#allocation5], %s341
          %343 = dma.done %s339, 512
        $region44: #{tpu_custom_call.1} parent=39 // pred_fallthru
          _
      $region40: #{tpu_custom_call.1} parent=5 // pred_fallthru
        _
    $region6: #{tpu_custom_call.1} parent=1 // loop_footer
      %s18 = sadd.s32 1, %s14
    $region7: #{tpu_custom_call.1} parent=1 // loop_footer_branch
      %13 = sbr.rel target = $region3
    $region8: #{tpu_custom_call.1} parent=1 // loop_exit
      _
    %344 = vsyncpa [#allocation3], 1
    %s345 = scalar_lea.sflag [#allocation3], 1
    %346 = vsyncpa %s345, 1
    %347 = vsyncpa [#allocation4], 1
    %s348 = scalar_lea.sflag [#allocation4], 1
    %349 = vsyncpa %s348, 1

</llo_original>
